<compile_context>
chip_gen: v5e
topology: v5e:2x2
jax: 0.10.0
libtpu: 0.0.40
codegen_flags: <defaults>
</compile_context>

<pallas_src>
import math

import jax
import jax.numpy as jnp
from jax.experimental import pallas as pl
from jax.experimental.pallas import tpu as pltpu


def _patch_embed_kernel(x_ref, w_ref, o_ref):
    """out_block = x_block @ w_fold   (single MXU matmul, f32 accumulation).

    x_ref : (rows_blk, L)                  rows = batch * n_vars, time on lanes
    w_ref : (L, n_patch * d_model)         folded pad+unfold+circular-conv matrix
    o_ref : (rows_blk, n_patch * d_model)  lane-dense output block
    """
    o_ref[...] = jnp.dot(
        x_ref[...], w_ref[...], preferred_element_type=jnp.float32
    ).astype(o_ref.dtype)


def _fold_weight(conv_w, L, patch_len, stride, n_patch):
    """Fold ReplicationPad1d + unfold + circular Conv1d(k=3) into one (L, n_patch*d_model) matrix.

    out[r, p, o] = sum_{t,c} conv_w[o, c, t] * x[r, min(((p+t-1) mod n_patch)*stride + c, L-1)]
    """
    d_model = conv_w.shape[0]
    p = jnp.arange(n_patch)[:, None, None]                       # (n_patch, 1, 1)
    t = jnp.arange(3)[None, :, None]                             # (1, 3, 1)
    c = jnp.arange(patch_len)[None, None, :]                     # (1, 1, patch_len)
    q = ((p + t - 1) % n_patch) * stride + c                     # index into padded series
    q = jnp.minimum(q, L - 1)                                    # replication pad -> clamp to last sample
    onehot = (q[..., None] == jnp.arange(L)).astype(jnp.float32)  # (n_patch, 3, patch_len, L)
    w_fold = jnp.einsum('ptcl,oct->lpo', onehot, conv_w.astype(jnp.float32))
    return w_fold.reshape(L, n_patch * d_model)


def patch_embedding(x, conv_w, patch_len, stride):
    """Pallas PatchEmbedding forward.

    x      : (B, n_vars, L) float
    conv_w : (d_model, patch_len, 3)  -- torch Conv1d weight layout (out, in, k)
    Returns (embeddings of shape (B * n_vars, n_patch, d_model), n_vars).
    """
    B, n_vars, L = x.shape
    d_model = conv_w.shape[0]
    n_patch = (L + stride - patch_len) // stride + 1
    BN = B * n_vars

    rows = x.reshape(BN, L).astype(jnp.float32)                  # contiguous, free
    w_fold = _fold_weight(conv_w, L, patch_len, stride, n_patch)

    cdiv = lambda a, b: -(-a // b)
    round_up = lambda a, m: cdiv(a, m) * m

    # Row-block sizing: as large as possible (per-step overhead ~0.35us dominates
    # tiny blocks on single-TC v5e/v6e), but >= 2 blocks when BN allows so both
    # v7x TensorCores get work, and capped so the output block stays well under
    # the scoped-VMEM default on every generation (double-buffered).
    out_row_bytes = n_patch * d_model * 4
    vmem_cap_rows = max(8, ((4 * 1024 * 1024) // out_row_bytes) // 8 * 8)
    if BN <= 8:
        rows_blk = 8
    else:
        rows_blk = min(1024, vmem_cap_rows, round_up(cdiv(BN, 2), 8))

    BN_pad = round_up(BN, rows_blk)
    if BN_pad != BN:
        rows = jnp.concatenate(
            [rows, jnp.zeros((BN_pad - BN, L), jnp.float32)], axis=0)
    grid = (BN_pad // rows_blk,)

    out_flat = pl.pallas_call(
        _patch_embed_kernel,
        grid=grid,
        in_specs=[
            pl.BlockSpec((rows_blk, L), lambda i: (i, 0)),
            pl.BlockSpec((L, n_patch * d_model), lambda i: (0, 0)),  # resident across steps
        ],
        out_specs=pl.BlockSpec((rows_blk, n_patch * d_model), lambda i: (i, 0)),
        out_shape=jax.ShapeDtypeStruct((BN_pad, n_patch * d_model), jnp.float32),
        compiler_params=pltpu.CompilerParams(
            dimension_semantics=("parallel",)),
    )(rows, w_fold)

    out = out_flat[:BN].reshape(BN, n_patch, d_model)
    # nn.Dropout is identity in eval mode.
    return out, n_vars


def patch_embedding_ref(x, conv_w, patch_len, stride):
    """Pure-JAX reference matching the torch module (for correctness check)."""
    B, n_vars, L = x.shape
    d_model = conv_w.shape[0]
    xpad = jnp.concatenate(
        [x, jnp.repeat(x[:, :, -1:], stride, axis=-1)], axis=-1)
    n_patch = (L + stride - patch_len) // stride + 1
    idx = jnp.arange(n_patch)[:, None] * stride + jnp.arange(patch_len)[None, :]
    patches = xpad[:, :, idx]                                    # (B, n_vars, n_patch, patch_len)
    patches = patches.reshape(B * n_vars, n_patch, patch_len)
    xc = jnp.transpose(patches, (0, 2, 1))                       # (BN, patch_len, n_patch)
    out = jnp.zeros((B * n_vars, d_model, n_patch), jnp.float32)
    for t in range(3):
        shifted = jnp.roll(xc, 1 - t, axis=-1)                   # tap t reads patch (p+t-1) mod n_patch
        out = out + jnp.einsum('oc,rcp->rop', conv_w[:, :, t].astype(jnp.float32), shifted)
    return jnp.transpose(out, (0, 2, 1)), n_vars


if __name__ == "__main__":
    key = jax.random.PRNGKey(0)
    kx, kw = jax.random.split(key)

    B, n_vars, L = 4, 4, 16                 # batch, channels (n_vars), series length
    patch_len, stride, d_model = 7, 1, 32   # gpt4battery hardcodes patch_len=7, stride=1

    x = jax.random.normal(kx, (B, n_vars, L), jnp.float32)
    fan_in = patch_len * 3                  # kaiming_normal_(fan_in, leaky_relu) equivalent scale
    conv_w = jax.random.normal(kw, (d_model, patch_len, 3), jnp.float32) * math.sqrt(2.0 / fan_in)

    out, nv = patch_embedding(x, conv_w, patch_len, stride)
    out = jax.block_until_ready(out)

    ref, _ = patch_embedding_ref(x, conv_w, patch_len, stride)
    n_patch = (L + stride - patch_len) // stride + 1
    assert nv == n_vars
    assert out.shape == (B * n_vars, n_patch, d_model), out.shape
    err = float(jnp.max(jnp.abs(out - ref)))
    assert jnp.allclose(out, ref, atol=1e-4, rtol=1e-4), err
    print("KERNEL_OK")
</pallas_src>

<mosaic_0001>
module attributes {stable_mosaic.version = 11 : i64} {
  func.func @_patch_embed_kernel(%arg0: i32, %arg1: memref<8x16xf32, #tpu.memory_space<vmem>>, %arg2: memref<16x352xf32, #tpu.memory_space<vmem>>, %arg3: memref<8x352xf32, #tpu.memory_space<vmem>>) attributes {dimension_semantics = [#tpu.dimension_semantics<parallel>], iteration_bounds = array<i64: 2>, scalar_prefetch = 0 : i64, scratch_operands = 0 : i64, tpu.core_type = #tpu.core_type<tc>, window_params = [{transform_indices = @transform_0, window_bounds = array<i64: 8, 16>}, {pipeline_mode = #tpu.pipeline_mode<synchronous>, transform_indices = @transform_1, window_bounds = array<i64: 16, 352>}, {transform_indices = @transform_2, window_bounds = array<i64: 8, 352>}]} {
    %c0 = arith.constant 0 : index
    %c0_0 = arith.constant 0 : index
    %0 = vector.load %arg1[%c0, %c0_0] : memref<8x16xf32, #tpu.memory_space<vmem>>, vector<8x16xf32>
    %c0_1 = arith.constant 0 : index
    %c0_2 = arith.constant 0 : index
    %1 = vector.load %arg2[%c0_1, %c0_2] : memref<16x352xf32, #tpu.memory_space<vmem>>, vector<16x352xf32>
    %cst = arith.constant dense<0.000000e+00> : vector<8x352xf32>
    %2 = tpu.matmul %0, %1, %cst {dimension_numbers = #tpu.dot_dimension_numbers<[1], [0], [0], [1], [0, 0, 1, 1], [], []>} : vector<8x16xf32>, vector<16x352xf32>, vector<8x352xf32> -> vector<8x352xf32>
    %c0_3 = arith.constant 0 : index
    %c0_4 = arith.constant 0 : index
    %3 = vector.load %arg3[%c0_3, %c0_4] : memref<8x352xf32, #tpu.memory_space<vmem>>, vector<8x352xf32>
    tpu.vector_store %arg3[%c0_3, %c0_4], %2 {strides = array<i32>} : memref<8x352xf32, #tpu.memory_space<vmem>>, vector<8x352xf32>,
    return
  }
  func.func @transform_0(%arg0: i32) -> (i32, i32) {
    %c0_i32 = arith.constant 0 : i32
    %c0_i32_0 = arith.constant 0 : i32
    return %arg0, %c0_i32 : i32, i32
  }
  func.func @transform_1(%arg0: i32) -> (i32, i32) {
    %c0_i32 = arith.constant 0 : i32
    %c0_i32_0 = arith.constant 0 : i32
    %c0_i32_1 = arith.constant 0 : i32
    return %c0_i32, %c0_i32_0 : i32, i32
  }
  func.func @transform_2(%arg0: i32) -> (i32, i32) {
    %c0_i32 = arith.constant 0 : i32
    %c0_i32_0 = arith.constant 0 : i32
    return %arg0, %c0_i32 : i32, i32
  }
}

</mosaic_0001>

<llo_original>
// kernel: tpu_custom_call.1
$region0: #{tpu_custom_call.1}
  #allocation0 [shape = 'u32[]', space=smem, size = 0x4, offset = 0x4, fixed_abs, tag = 'smem constant byte address 0x4 - core index']
  #allocation1 [shape = 'u32[72,128]{1,0:T(1,128)}', space=vmem, size = 0x9000, scoped, tag = 'internal scratch']
  %s0 = inlined_call_operand.hbm [shape: f32[16,16], index: 0, kind: input, shape index: {}]
  %s1 = inlined_call_operand.hbm [shape: f32[16,352], index: 1, kind: input, shape index: {}]
  %s2 = inlined_call_operand.hbm [shape: f32[16,352], index: 2, kind: output, shape index: {}]
  %s3 = sld [smem:[#allocation0]]
  $region49: #{tpu_custom_call.1} parent=0
    _
  %s5 = ssub.s32 1, %s3
  %s6 = scalar_select 0, %s5, %s3
  $region1: #{tpu_custom_call.1} parent=0
    #allocation2 [shape = 'u8[8192]{0}', space=vmem, size = 0x2000, scoped, tag = 'input window, operand 0']
    #allocation3 [shape = 's32[2]{0}', space=sflag, size = 0x8, scoped, tag = 'scoped memory for tpu_custom_call.1']
    #allocation4 [shape = 's32[2]{0}', space=sflag, size = 0x8, scoped, tag = 'scoped memory for tpu_custom_call.1']
    #allocation5 [shape = 'u8[24576]{0}', space=vmem, size = 0x6000, scoped, tag = 'input window, operand 1, single buffered']
    #allocation6 [shape = 's32[1]{0}', space=sflag, size = 0x4, scoped, tag = 'scoped memory for tpu_custom_call.1']
    #allocation7 [shape = 'u8[24576]{0}', space=vmem, size = 0x6000, scoped, tag = 'output window, operand 0']
    %7 = vsyncpa [#allocation3], 0
    %s8 = scalar_lea.sflag [#allocation3], 1
    %9 = vsyncpa %s8, 0
    %10 = vsyncpa [#allocation6], 0
    %11 = vsyncpa [#allocation4], 0
    %s12 = scalar_lea.sflag [#allocation4], 1
    %13 = vsyncpa %s12, 0
    loop: start=0, step=1, limit=4
    $region2: #{tpu_custom_call.1} parent=1 // loop_pre_header
      _
    $region3: #{tpu_custom_call.1} parent=1 // loop_header
      %s15 = sphi 0, %s19
      %p16 = scmp.ge.s32.totalorder %s15, 4
      %s25 = sphi 0, %s27
      %s28 = sphi 0, %s25
      %s29 = sphi 0, %s28
      %s45 = sphi 0, %s29
      %s49 = sphi 0, %s49
      %s51 = sphi 0, %s49
      %s52 = sphi 0, %s51
      %s66 = sphi 0, %s52
      %s72 = sphi 0, %s74
      %s75 = sphi 0, %s72
      %s76 = sphi 0, %s75
      %s92 = sphi 0, %s76
    $region4: #{tpu_custom_call.1} parent=1 // loop_header_branch
      %18 = sbr.rel (%p16) target = $region8
    $region5: #{tpu_custom_call.1} parent=1 // loop_body
      %s20 = ssub.s32 %s15, 1
      %s21 = ssub.s32 %s15, 2
      %s22 = sadd.s32 %s15, 1
      %s23 = ssub.s32 %s15, %s22
      %p24 = scmp.eq.s32.totalorder %s23, 0
      %s26 = sadd.s32 %s25, 1
      %s27 = scalar_select %p24, %s25, %s26
      %p30 = pneg %p24
      %p31 = scmp.eq.s32.totalorder %s15, 1
      %p32 = por %p30, %p31
      %p33 = scmp.ne.s32.totalorder %s25, %s28
      %p34 = scmp.eq.s32.totalorder %s15, 0
      %p35 = por %p33, %p34
      %p36 = scmp.ne.s32.totalorder %s25, %s28
      %p37 = scmp.eq.s32.totalorder %s20, 1
      %p38 = por %p36, %p37
      %p39 = scmp.ne.s32.totalorder %s28, %s29
      %p40 = scmp.eq.s32.totalorder %s20, 0
      %p41 = por %p39, %p40
      %p42 = scmp.ne.s32.totalorder %s28, %s29
      %p43 = scmp.eq.s32.totalorder %s21, 1
      %p44 = por %p42, %p43
      %p46 = scmp.ne.s32.totalorder %s29, %s45
      %p47 = scmp.eq.s32.totalorder %s21, 0
      %p48 = por %p46, %p47
      %s50 = sadd.s32 %s49, 1
      %p53 = scmp.eq.s32.totalorder %s15, 1
      %p54 = scmp.ne.s32.totalorder %s49, %s51
      %p55 = scmp.eq.s32.totalorder %s15, 0
      %p56 = por %p54, %p55
      %p57 = scmp.ne.s32.totalorder %s49, %s51
      %p58 = scmp.eq.s32.totalorder %s20, 1
      %p59 = por %p57, %p58
      %p60 = scmp.ne.s32.totalorder %s51, %s52
      %p61 = scmp.eq.s32.totalorder %s20, 0
      %p62 = por %p60, %p61
      %p63 = scmp.ne.s32.totalorder %s51, %s52
      %p64 = scmp.eq.s32.totalorder %s21, 1
      %p65 = por %p63, %p64
      %p67 = scmp.ne.s32.totalorder %s52, %s66
      %p68 = scmp.eq.s32.totalorder %s21, 0
      %p69 = por %p67, %p68
      %s70 = ssub.s32 %s15, %s22
      %p71 = scmp.eq.s32.totalorder %s70, 0
      %s73 = sadd.s32 %s72, 1
      %s74 = scalar_select %p71, %s72, %s73
      %p77 = pneg %p71
      %p78 = scmp.eq.s32.totalorder %s15, 1
      %p79 = por %p77, %p78
      %p80 = scmp.ne.s32.totalorder %s72, %s75
      %p81 = scmp.eq.s32.totalorder %s15, 0
      %p82 = por %p80, %p81
      %p83 = scmp.ne.s32.totalorder %s72, %s75
      %p84 = scmp.eq.s32.totalorder %s20, 1
      %p85 = por %p83, %p84
      %p86 = scmp.ne.s32.totalorder %s75, %s76
      %p87 = scmp.eq.s32.totalorder %s20, 0
      %p88 = por %p86, %p87
      %p89 = scmp.ne.s32.totalorder %s75, %s76
      %p90 = scmp.eq.s32.totalorder %s21, 1
      %p91 = por %p89, %p90
      %p93 = scmp.ne.s32.totalorder %s76, %s92
      %p94 = scmp.eq.s32.totalorder %s21, 0
      %p95 = por %p93, %p94
      %p96 = scmp.le.s32.totalorder 1, %s15
      %p97 = scmp.lt.s32.totalorder %s15, 3
      %p98 = pnand %p96, %p97
      %p99 = pneg %p98
      // Predicated region
      $region9: #{tpu_custom_call.1} parent=5 // pred_check
        _
      $region10: #{tpu_custom_call.1} parent=5 // pred_check_branch
        %101 = sbr.rel (%p98) target = $region12
      $region11: #{tpu_custom_call.1} parent=5 // pred_region
        %s102 = ssub.s32 %s15, 1
        // Predicated region
        $region13: #{tpu_custom_call.1} parent=11 // pred_check
          %p103 = pneg %p62
        $region14: #{tpu_custom_call.1} parent=11 // pred_check_branch
          %105 = sbr.rel (%p103) target = $region16
        $region15: #{tpu_custom_call.1} parent=11 // pred_region
          %107 = vsyncadd [#allocation6], 0
          %s108 = sshll.u32 %s1, 4
          %s109 = int_to_ptr.hbm [resolvable:$true] %s108
          %s110 = sshll.u32 [#allocation5], 4
          %s111 = int_to_ptr.vmem [resolvable:$true] %s110
          %116 = dma.hbm_to_vmem [thread:$0]  %s109, 768, %s111, [#allocation6], 384, 384, 24
        $region16: #{tpu_custom_call.1} parent=11 // pred_fallthru
          _
      $region12: #{tpu_custom_call.1} parent=5 // pred_fallthru
        _
      %p117 = scmp.lt.s32.totalorder %s15, 2
      // Predicated region
      $region17: #{tpu_custom_call.1} parent=5 // pred_check
        %p118 = pneg %p117
      $region18: #{tpu_custom_call.1} parent=5 // pred_check_branch
        %120 = sbr.rel (%p118) target = $region20
      $region19: #{tpu_custom_call.1} parent=5 // pred_region
        // Predicated region
        $region21: #{tpu_custom_call.1} parent=19 // pred_check
          %p121 = pneg %p35
        $region22: #{tpu_custom_call.1} parent=19 // pred_check_branch
          %123 = sbr.rel (%p121) target = $region24
        $region23: #{tpu_custom_call.1} parent=19 // pred_region
          %s124 = sand.u32 %s25, 1
          %s125 = scalar_lea.sflag [#allocation3], %s124
          %s126 = sand.u32 %s25, 1
          %s127 = smul.addr %s126, 8
          %s128 = scalar_lea.vmem [#allocation2], %s127
          %130 = vsyncadd %s125, 0
          %s131 = smul.addr %s15, 8
          %s132 = scalar_lea.hbm %s0, %s131
          %s134 = sshll.u32 %s132, 4
          %s135 = int_to_ptr.hbm [resolvable:$true] %s134
          %s136 = sshll.u32 %s128, 4
          %s137 = int_to_ptr.vmem [resolvable:$true] %s136
          %139 = dma.hbm_to_vmem [thread:$0]  %s135, 128, %s137, %s125
        $region24: #{tpu_custom_call.1} parent=19 // pred_fallthru
          _
      $region20: #{tpu_custom_call.1} parent=5 // pred_fallthru
        _
      %p140 = scmp.le.s32.totalorder 1, %s15
      %p141 = scmp.lt.s32.totalorder %s15, 3
      %p142 = pnand %p140, %p141
      %p143 = pneg %p142
      // Predicated region
      $region25: #{tpu_custom_call.1} parent=5 // pred_check
        _
      $region26: #{tpu_custom_call.1} parent=5 // pred_check_branch
        %145 = sbr.rel (%p142) target = $region28
      $region27: #{tpu_custom_call.1} parent=5 // pred_region
        %s146 = ssub.s32 %s15, 1
        %s147 = sand.u32 %s28, 1
        %s148 = scalar_lea.sflag [#allocation3], %s147
        %s149 = sand.u32 %s28, 1
        %s150 = smul.addr %s149, 8
        %s151 = scalar_lea.vmem [#allocation2], %s150
        // Predicated region
        $region29: #{tpu_custom_call.1} parent=27 // pred_check
          %p152 = pneg %p41
        $region30: #{tpu_custom_call.1} parent=27 // pred_check_branch
          %154 = sbr.rel (%p152) target = $region32
        $region31: #{tpu_custom_call.1} parent=27 // pred_region
          %156 = dma.done %s148, 128
        $region32: #{tpu_custom_call.1} parent=27 // pred_fallthru
          _
        // Predicated region
        $region33: #{tpu_custom_call.1} parent=27 // pred_check
          %p157 = pneg %p62
        $region34: #{tpu_custom_call.1} parent=27 // pred_check_branch
          %159 = sbr.rel (%p157) target = $region36
        $region35: #{tpu_custom_call.1} parent=27 // pred_region
          %161 = dma.done [#allocation6], 768
        $region36: #{tpu_custom_call.1} parent=27 // pred_fallthru
          _
        %s162 = sand.u32 %s28, 1
        %s163 = scalar_lea.sflag [#allocation3], %s162
        %s164 = sand.u32 %s28, 1
        %s165 = smul.addr %s164, 8
        %s166 = scalar_lea.vmem [#allocation2], %s165
        %p167 = pneg %p41
        %p168 = pneg %p38
        %p169 = pneg %p62
        %p170 = pneg %p59
        %p171 = pneg %p88
        %p172 = pneg %p85
        %s173 = sand.u32 %s75, 1
        %s174 = scalar_lea.sflag [#allocation4], %s173
        %s175 = sand.u32 %s75, 1
        %s176 = smul.addr %s175, 24
        %s177 = scalar_lea.vmem [#allocation7], %s176
        %v178 = vld [vmem:[%s151] sm:$0xff]
        %v179 = vld [vmem:[#allocation5] sm:$0xff]
        %v180 = vld [vmem:[#allocation5 + $0x8] sm:$0xff]
        %v181 = vld [vmem:[#allocation5 + $0x10] sm:$0xff]
        %v182 = vld [vmem:[#allocation5 + $0x18] sm:$0xff]
        %v183 = vld [vmem:[#allocation5 + $0x20] sm:$0xff]
        %v184 = vld [vmem:[#allocation5 + $0x28] sm:$0xff]
        %vm185 = vcmask 130048
        %v187 = vsel %vm185, %v178, 0
        %189 = vmatpush.msra.mxu0 0.0
        %190 = vmatpush.msra.mxu0 0.0
        %191 = vmatpush.msra.mxu0 0.0
        %192 = vmatpush.msra.mxu0 0.0
        %193 = vmatpush.msra.mxu0 0.0
        %194 = vmatpush.msra.mxu0 0.0
        %195 = vmatpush.msra.mxu0 0.0
        %196 = vmatpush.msra.mxu0 0.0
        %197 = vmatpush.msra.mxu0 0.0
        %198 = vmatpush.msra.mxu0 0.0
        %199 = vmatpush.msra.mxu0 0.0
        %200 = vmatpush.msra.mxu0 0.0
        %201 = vmatpush.msra.mxu0 0.0
        %202 = vmatpush.msra.mxu0 0.0
        %203 = vmatpush.msra.mxu0 %v182
        %204 = vmatpush.msra.mxu0 %v179
        %205 = vmatmul.f32.gmra.mxu0 %v187
        %v206 = vpop.f32.mrf.mxu0
        %v207 = vadd.f32 0.0, %v206
        %208 = vdwg.mxu0
        %209 = vmatpush.msra.mxu0 0.0
        %210 = vmatpush.msra.mxu0 0.0
        %211 = vmatpush.msra.mxu0 0.0
        %212 = vmatpush.msra.mxu0 0.0
        %213 = vmatpush.msra.mxu0 0.0
        %214 = vmatpush.msra.mxu0 0.0
        %215 = vmatpush.msra.mxu0 0.0
        %216 = vmatpush.msra.mxu0 0.0
        %217 = vmatpush.msra.mxu0 0.0
        %218 = vmatpush.msra.mxu0 0.0
        %219 = vmatpush.msra.mxu0 0.0
        %220 = vmatpush.msra.mxu0 0.0
        %221 = vmatpush.msra.mxu0 0.0
        %222 = vmatpush.msra.mxu0 0.0
        %223 = vmatpush.msra.mxu0 %v183
        %224 = vmatpush.msra.mxu0 %v180
        %225 = vmatmul.f32.gmra.mxu0 %v187
        %v226 = vpop.f32.mrf.mxu0
        %v227 = vadd.f32 0.0, %v226
        %228 = vdwg.mxu0
        %229 = vmatpush.msra.mxu0 0.0
        %230 = vmatpush.msra.mxu0 0.0
        %231 = vmatpush.msra.mxu0 0.0
        %232 = vmatpush.msra.mxu0 0.0
        %233 = vmatpush.msra.mxu0 0.0
        %234 = vmatpush.msra.mxu0 0.0
        %235 = vmatpush.msra.mxu0 0.0
        %236 = vmatpush.msra.mxu0 0.0
        %237 = vmatpush.msra.mxu0 0.0
        %238 = vmatpush.msra.mxu0 0.0
        %239 = vmatpush.msra.mxu0 0.0
        %240 = vmatpush.msra.mxu0 0.0
        %241 = vmatpush.msra.mxu0 0.0
        %242 = vmatpush.msra.mxu0 0.0
        %243 = vmatpush.msra.mxu0 %v184
        %244 = vmatpush.msra.mxu0 %v181
        %245 = vmatmul.f32.gmra.mxu0 %v187
        %v246 = vpop.f32.mrf.mxu0
        %v247 = vadd.f32 0.0, %v246
        %248 = vdwg.mxu0
        %249 = vst [vmem:[%s177] sm:$0xff] %v207
        %250 = vst [vmem:[%s177 + $0x8] sm:$0xff] %v227
        %vm251 = vcmask 785408
        %252 = vst.msk [vmem:[%s177 + $0x10] sm:$0xff] %vm251, %v247
        %s253 = sand.u32 %s75, 1
        %s254 = scalar_lea.sflag [#allocation4], %s253
        %s255 = sand.u32 %s75, 1
        %s256 = smul.addr %s255, 24
        %s257 = scalar_lea.vmem [#allocation7], %s256
        // Predicated region
        $region37: #{tpu_custom_call.1} parent=27 // pred_check
          %p258 = pneg %p85
        $region38: #{tpu_custom_call.1} parent=27 // pred_check_branch
          %260 = sbr.rel (%p258) target = $region40
        $region39: #{tpu_custom_call.1} parent=27 // pred_region
          %262 = vsyncadd %s254, 0
          %s263 = smul.addr %s20, 3
          %s264 = smul.addr %s263, 8
          %s265 = scalar_lea.hbm %s2, %s264
          %s267 = sshll.u32 %s257, 4
          %s268 = int_to_ptr.vmem [resolvable:$true] %s267
          %s269 = sshll.u32 %s265, 4
          %s270 = int_to_ptr.hbm [resolvable:$true] %s269
          %272 = dma.vmem_to_hbm [thread:$0]  %s268, 384, %s270, %s254
        $region40: #{tpu_custom_call.1} parent=27 // pred_fallthru
          _
      $region28: #{tpu_custom_call.1} parent=5 // pred_fallthru
        _
      %p273 = scmp.le.s32.totalorder 2, %s15
      // Predicated region
      $region41: #{tpu_custom_call.1} parent=5 // pred_check
        %p274 = pneg %p273
      $region42: #{tpu_custom_call.1} parent=5 // pred_check_branch
        %276 = sbr.rel (%p274) target = $region44
      $region43: #{tpu_custom_call.1} parent=5 // pred_region
        %s277 = ssub.s32 %s15, 2
        // Predicated region
        $region45: #{tpu_custom_call.1} parent=43 // pred_check
          %p278 = pneg %p91
        $region46: #{tpu_custom_call.1} parent=43 // pred_check_branch
          %280 = sbr.rel (%p278) target = $region48
        $region47: #{tpu_custom_call.1} parent=43 // pred_region
          %s281 = sand.u32 %s76, 1
          %s282 = scalar_lea.sflag [#allocation4], %s281
          %s283 = sand.u32 %s76, 1
          %s284 = smul.addr %s283, 24
          %s285 = scalar_lea.vmem [#allocation7], %s284
          %287 = dma.done %s282, 384
        $region48: #{tpu_custom_call.1} parent=43 // pred_fallthru
          _
      $region44: #{tpu_custom_call.1} parent=5 // pred_fallthru
        _
    $region6: #{tpu_custom_call.1} parent=1 // loop_footer
      %s19 = sadd.s32 1, %s15
    $region7: #{tpu_custom_call.1} parent=1 // loop_footer_branch
      %14 = sbr.rel target = $region3
    $region8: #{tpu_custom_call.1} parent=1 // loop_exit
      _
    %288 = vsyncpa [#allocation3], 1
    %s289 = scalar_lea.sflag [#allocation3], 1
    %290 = vsyncpa %s289, 1
    %291 = vsyncpa [#allocation6], 1
    %292 = vsyncpa [#allocation4], 1
    %s293 = scalar_lea.sflag [#allocation4], 1
    %294 = vsyncpa %s293, 1

</llo_original>
